<compile_context>
chip_gen: v7x
topology: tpu7x:2x2x1
jax: 0.10.0
libtpu: 0.0.40
codegen_flags: <defaults>
</compile_context>

<pallas_src>
import functools

import jax
import jax.numpy as jnp
from jax.experimental import pallas as pl
from jax.experimental.pallas import tpu as pltpu


def _discriminator_kernel(x_ref, w1_ref, b1_ref, w2_ref, b2_ref,
                          w3_ref, b3_ref, o_ref):
    """Fused fc1 -> LeakyReLU -> fc2 -> LeakyReLU -> out -> sigmoid (one batch tile)."""
    neg_slope = jnp.float32(0.2)

    # x arrives as f32 straight from HBM; the bf16 cast for the MXU happens
    # here (VPU op, hidden under the x DMA) so there is no extra HBM pass.
    x_bf = x_ref[...].astype(jnp.bfloat16)

    # fc1: bf16 MXU matmul with f32 accumulation; elementwise math in f32.
    h1 = jnp.dot(x_bf, w1_ref[...],
                 preferred_element_type=jnp.float32) + b1_ref[...]
    h1 = jnp.where(h1 > 0, h1, neg_slope * h1)

    # fc2: cast activations back to bf16 for the MXU, accumulate in f32.
    h2 = jnp.dot(h1.astype(jnp.bfloat16), w2_ref[...],
                 preferred_element_type=jnp.float32) + b2_ref[...]
    h2 = jnp.where(h2 > 0, h2, neg_slope * h2)

    # out (N=1): VPU multiply + cross-lane reduction instead of a 1-column MXU
    # matmul; b3 is a scalar read from SMEM.
    logits = jnp.sum(h2 * w3_ref[...], axis=-1) + b3_ref[0]        # (block_b,)

    # Lane-dense (1, block_b//128, 128) slab store (or (B, 1) for tiny batches).
    o_ref[...] = jax.nn.sigmoid(logits).reshape(o_ref.shape).astype(o_ref.dtype)


def _ceil_div(a, b):
    return -(-a // b)


def _round_up(a, m):
    return _ceil_div(a, m) * m


@functools.partial(jax.jit, static_argnames=("block_b_max",))
def discriminator_forward(x, params, *, block_b_max=8192):
    """x: (B, F) float32.  params: dict of w1,b1,w2,b2,w3,b3 (weights (in,out))."""
    B, F = x.shape
    H1 = params["w1"].shape[1]
    H2 = params["w2"].shape[1]

    x = x.astype(jnp.float32)                       # single f32 HBM read in-kernel
    w1 = params["w1"].astype(jnp.bfloat16)
    w2 = params["w2"].astype(jnp.bfloat16)
    b1 = params["b1"].astype(jnp.float32).reshape(1, H1)
    b2 = params["b2"].astype(jnp.float32).reshape(1, H2)
    w3 = params["w3"].astype(jnp.float32).reshape(1, H2)   # row vector for VPU reduce
    b3 = params["b3"].astype(jnp.float32).reshape(1,)      # scalar, lives in SMEM

    # ---- batch tiling --------------------------------------------------------
    lane_dense = B >= 128
    if lane_dense:
        B128 = _round_up(B, 128)
        # Keep the double-buffered f32 x tile + f32/bf16 intermediates within a
        # conservative ~20 MiB budget (fits v7x's smaller scoped VMEM).
        per_row_bytes = 8 * F + 8 * (H1 + H2) + 2 * 128 * 4
        vmem_rows = max(128, ((20 << 20) // per_row_bytes) // 128 * 128)
        bmax = max(128, min(block_b_max, vmem_rows))
        # >= 2 tiles once the batch is big enough, so v7x's 2 TensorCores both
        # get work via the "parallel" grid axis.
        min_tiles = 2 if B128 >= 4096 else 1
        num_tiles = max(min_tiles, _ceil_div(B128, bmax))
        block_b = _round_up(_ceil_div(B128, num_tiles), 128)
        num_tiles = _ceil_div(B128, block_b)
        rows = block_b // 128
        # No jnp.pad over x: if B % block_b != 0 the last block is a partial
        # boundary block (Pallas clamps the DMA); the garbage tail rows produce
        # garbage outputs that are sliced off below.
        out_shape = jax.ShapeDtypeStruct((num_tiles, rows, 128), jnp.float32)
        out_specs = pl.BlockSpec((1, rows, 128), lambda i: (i, 0, 0))
    else:
        # Tiny batch: one full-extent block, plain (B, 1) output (perf irrelevant).
        block_b, num_tiles = B, 1
        out_shape = jax.ShapeDtypeStruct((B, 1), jnp.float32)
        out_specs = pl.BlockSpec((B, 1), lambda i: (0, 0))

    rows_covered = num_tiles * block_b
    flops = 2 * rows_covered * (F * H1 + H1 * H2 + H2)
    bytes_accessed = (B * F * 4                    # x (f32, single read)
                      + (F * H1 + H1 * H2) * 2     # w1, w2 (bf16)
                      + (H1 + 2 * H2 + 1) * 4      # b1, b2, w3, b3 (f32)
                      + rows_covered * 4)          # output (f32)
    cost = pl.CostEstimate(flops=flops, transcendentals=rows_covered,
                           bytes_accessed=bytes_accessed)

    in_specs = [
        pl.BlockSpec((block_b, F), lambda i: (i, 0)),          # streaming x tile
        pl.BlockSpec((F, H1), lambda i: (0, 0)),               # w1 (whole)
        pl.BlockSpec((1, H1), lambda i: (0, 0)),               # b1
        pl.BlockSpec((H1, H2), lambda i: (0, 0)),              # w2 (whole)
        pl.BlockSpec((1, H2), lambda i: (0, 0)),               # b2
        pl.BlockSpec((1, H2), lambda i: (0, 0)),               # w3 row
        pl.BlockSpec(memory_space=pltpu.MemorySpace.SMEM),     # b3 scalar (1-D)
    ]

    out = pl.pallas_call(
        _discriminator_kernel,
        out_shape=out_shape,
        grid_spec=pltpu.PrefetchScalarGridSpec(
            num_scalar_prefetch=0,
            grid=(num_tiles,),
            in_specs=in_specs,
            out_specs=out_specs,
        ),
        compiler_params=pltpu.CompilerParams(
            dimension_semantics=("parallel",)),
        cost_estimate=cost,
    )(x, w1, b1, w2, b2, w3, b3)

    if lane_dense:
        # Flatten the lane-dense slabs back to (B, 1), dropping any padded tail.
        out = out.reshape(num_tiles * block_b, 1)[:B]
    return out


def init_discriminator_params(key, input_features):
    """Deterministic init matching nn.Linear's U(-1/sqrt(fan_in), 1/sqrt(fan_in)).

    Weights returned as (in_features, out_features) = transpose of PyTorch's
    (out, in) layout; biases as (1, out_features)."""
    h1 = input_features // 2
    h2 = input_features // 4
    dims = [(input_features, h1), (h1, h2), (h2, 1)]
    params = {}
    for idx, (fan_in, fan_out) in enumerate(dims, start=1):
        key, kw, kb = jax.random.split(key, 3)
        bound = 1.0 / jnp.sqrt(jnp.float32(fan_in))
        params[f"w{idx}"] = jax.random.uniform(
            kw, (fan_in, fan_out), jnp.float32, -bound, bound)
        params[f"b{idx}"] = jax.random.uniform(
            kb, (1, fan_out), jnp.float32, -bound, bound)
    return params


def _reference_forward(x, params):
    """Plain-JAX f32 reference mirroring the PyTorch module exactly."""
    def lrelu(v):
        return jnp.where(v > 0, v, 0.2 * v)
    h = lrelu(x @ params["w1"] + params["b1"])
    h = lrelu(h @ params["w2"] + params["b2"])
    return jax.nn.sigmoid(h @ params["w3"] + params["b3"])


if __name__ == "__main__":
    key = jax.random.PRNGKey(0)
    key, kx1, kx2 = jax.random.split(key, 3)

    input_features = 128  # -> fc1: 128->64, fc2: 64->32, out: 32->1
    params = init_discriminator_params(key, input_features)

    # 1) Small-batch path (full-extent block, (B, 1) output).
    x_small = jax.random.normal(kx1, (8, input_features), jnp.float32)
    out_small = jax.block_until_ready(discriminator_forward(x_small, params))
    ref_small = _reference_forward(x_small, params)
    assert out_small.shape == (8, 1), out_small.shape
    err_s = float(jnp.max(jnp.abs(out_small - ref_small)))
    assert jnp.allclose(out_small, ref_small, atol=1e-2, rtol=1e-2), f"max_err={err_s}"

    # 2) Lane-dense streaming path (batch tiled over the grid).
    x_big = jax.random.normal(kx2, (512, input_features), jnp.float32)
    out_big = jax.block_until_ready(discriminator_forward(x_big, params))
    ref_big = _reference_forward(x_big, params)
    assert out_big.shape == (512, 1), out_big.shape
    err_b = float(jnp.max(jnp.abs(out_big - ref_big)))
    assert jnp.allclose(out_big, ref_big, atol=1e-2, rtol=1e-2), f"max_err={err_b}"

    print("KERNEL_OK")
</pallas_src>

<mosaic_0001>
module attributes {stable_mosaic.version = 11 : i64} {
  func.func @_discriminator_kernel(%arg0: i32, %arg1: memref<8x128xf32, #tpu.memory_space<vmem>>, %arg2: memref<128x64xbf16, #tpu.memory_space<vmem>>, %arg3: memref<1x64xf32, #tpu.memory_space<vmem>>, %arg4: memref<64x32xbf16, #tpu.memory_space<vmem>>, %arg5: memref<1x32xf32, #tpu.memory_space<vmem>>, %arg6: memref<1x32xf32, #tpu.memory_space<vmem>>, %arg7: memref<1xf32, #tpu.memory_space<smem>>, %arg8: memref<8x1xf32, #tpu.memory_space<vmem>>) attributes {dimension_semantics = [#tpu.dimension_semantics<parallel>], iteration_bounds = array<i64: 1>, scalar_prefetch = 0 : i64, scratch_operands = 0 : i64, tpu.core_type = #tpu.core_type<tc>, window_params = [{transform_indices = @transform_0, window_bounds = array<i64: 8, 128>}, {pipeline_mode = #tpu.pipeline_mode<synchronous>, transform_indices = @transform_1, window_bounds = array<i64: 128, 64>}, {pipeline_mode = #tpu.pipeline_mode<synchronous>, transform_indices = @transform_2, window_bounds = array<i64: 1, 64>}, {pipeline_mode = #tpu.pipeline_mode<synchronous>, transform_indices = @transform_3, window_bounds = array<i64: 64, 32>}, {pipeline_mode = #tpu.pipeline_mode<synchronous>, transform_indices = @transform_4, window_bounds = array<i64: 1, 32>}, {pipeline_mode = #tpu.pipeline_mode<synchronous>, transform_indices = @transform_5, window_bounds = array<i64: 1, 32>}, {transform_indices = @transform_6, window_bounds = array<i64: 1>}, {pipeline_mode = #tpu.pipeline_mode<synchronous>, transform_indices = @transform_7, window_bounds = array<i64: 8, 1>}]} {
    %c0 = arith.constant 0 : index
    %c0_0 = arith.constant 0 : index
    %0 = vector.load %arg1[%c0, %c0_0] : memref<8x128xf32, #tpu.memory_space<vmem>>, vector<8x128xf32>
    %1 = arith.truncf %0 : vector<8x128xf32> to vector<8x128xbf16>
    %c0_1 = arith.constant 0 : index
    %c0_2 = arith.constant 0 : index
    %2 = vector.load %arg2[%c0_1, %c0_2] : memref<128x64xbf16, #tpu.memory_space<vmem>>, vector<128x64xbf16>
    %cst = arith.constant dense<0.000000e+00> : vector<8x64xf32>
    %3 = tpu.matmul %1, %2, %cst {dimension_numbers = #tpu.dot_dimension_numbers<[1], [0], [0], [1], [0, 0, 1, 1], [], []>} : vector<8x128xbf16>, vector<128x64xbf16>, vector<8x64xf32> -> vector<8x64xf32>
    %c0_3 = arith.constant 0 : index
    %c0_4 = arith.constant 0 : index
    %4 = vector.load %arg3[%c0_3, %c0_4] : memref<1x64xf32, #tpu.memory_space<vmem>>, vector<1x64xf32>
    %5 = vector.broadcast %4 : vector<1x64xf32> to vector<8x64xf32>
    %6 = arith.addf %3, %5 : vector<8x64xf32>
    %cst_5 = arith.constant 0.000000e+00 : f32
    %7 = vector.broadcast %cst_5 : f32 to vector<8x64xf32>
    %8 = arith.cmpf ogt, %6, %7 : vector<8x64xf32>
    %cst_6 = arith.constant 2.000000e-01 : f32
    %9 = vector.broadcast %cst_6 : f32 to vector<8x64xf32>
    %10 = arith.mulf %9, %6 : vector<8x64xf32>
    %11 = arith.select %8, %6, %10 : vector<8x64xi1>, vector<8x64xf32>
    %12 = arith.truncf %11 : vector<8x64xf32> to vector<8x64xbf16>
    %c0_7 = arith.constant 0 : index
    %c0_8 = arith.constant 0 : index
    %13 = vector.load %arg4[%c0_7, %c0_8] : memref<64x32xbf16, #tpu.memory_space<vmem>>, vector<64x32xbf16>
    %cst_9 = arith.constant dense<0.000000e+00> : vector<8x32xf32>
    %14 = tpu.matmul %12, %13, %cst_9 {dimension_numbers = #tpu.dot_dimension_numbers<[1], [0], [0], [1], [0, 0, 1, 1], [], []>} : vector<8x64xbf16>, vector<64x32xbf16>, vector<8x32xf32> -> vector<8x32xf32>
    %c0_10 = arith.constant 0 : index
    %c0_11 = arith.constant 0 : index
    %15 = vector.load %arg5[%c0_10, %c0_11] : memref<1x32xf32, #tpu.memory_space<vmem>>, vector<1x32xf32>
    %16 = vector.broadcast %15 : vector<1x32xf32> to vector<8x32xf32>
    %17 = arith.addf %14, %16 : vector<8x32xf32>
    %cst_12 = arith.constant 0.000000e+00 : f32
    %18 = vector.broadcast %cst_12 : f32 to vector<8x32xf32>
    %19 = arith.cmpf ogt, %17, %18 : vector<8x32xf32>
    %cst_13 = arith.constant 2.000000e-01 : f32
    %20 = vector.broadcast %cst_13 : f32 to vector<8x32xf32>
    %21 = arith.mulf %20, %17 : vector<8x32xf32>
    %22 = arith.select %19, %17, %21 : vector<8x32xi1>, vector<8x32xf32>
    %c0_14 = arith.constant 0 : index
    %c0_15 = arith.constant 0 : index
    %23 = vector.load %arg6[%c0_14, %c0_15] : memref<1x32xf32, #tpu.memory_space<vmem>>, vector<1x32xf32>
    %24 = vector.broadcast %23 : vector<1x32xf32> to vector<8x32xf32>
    %25 = arith.mulf %22, %24 : vector<8x32xf32>
    %cst_16 = arith.constant dense<0.000000e+00> : vector<8xf32>
    %26 = vector.multi_reduction <add>, %25, %cst_16 [1] : vector<8x32xf32> to vector<8xf32>
    %c0_17 = arith.constant 0 : index
    %27 = memref.load %arg7[%c0_17] : memref<1xf32, #tpu.memory_space<smem>>
    %28 = vector.broadcast %27 : f32 to vector<8xf32>
    %29 = arith.addf %26, %28 : vector<8xf32>
    %30 = arith.negf %29 : vector<8xf32>
    %31 = math.exp %30 : vector<8xf32>
    %cst_18 = arith.constant 1.000000e+00 : f32
    %32 = vector.broadcast %cst_18 : f32 to vector<8xf32>
    %33 = arith.addf %32, %31 : vector<8xf32>
    %34 = arith.divf %32, %33 : vector<8xf32>
    %35 = vector.shape_cast %34 : vector<8xf32> to vector<8x1xf32>
    %c0_19 = arith.constant 0 : index
    %c0_20 = arith.constant 0 : index
    %36 = vector.load %arg8[%c0_19, %c0_20] : memref<8x1xf32, #tpu.memory_space<vmem>>, vector<8x1xf32>
    tpu.vector_store %arg8[%c0_19, %c0_20], %35 {strides = array<i32>} : memref<8x1xf32, #tpu.memory_space<vmem>>, vector<8x1xf32>,
    return
  }
  func.func @transform_0(%arg0: i32) -> (i32, i32) {
    %c0_i32 = arith.constant 0 : i32
    %c0_i32_0 = arith.constant 0 : i32
    return %arg0, %c0_i32 : i32, i32
  }
  func.func @transform_1(%arg0: i32) -> (i32, i32) {
    %c0_i32 = arith.constant 0 : i32
    %c0_i32_0 = arith.constant 0 : i32
    %c0_i32_1 = arith.constant 0 : i32
    return %c0_i32, %c0_i32_0 : i32, i32
  }
  func.func @transform_2(%arg0: i32) -> (i32, i32) {
    %c0_i32 = arith.constant 0 : i32
    %c0_i32_0 = arith.constant 0 : i32
    %c0_i32_1 = arith.constant 0 : i32
    return %c0_i32, %c0_i32_0 : i32, i32
  }
  func.func @transform_3(%arg0: i32) -> (i32, i32) {
    %c0_i32 = arith.constant 0 : i32
    %c0_i32_0 = arith.constant 0 : i32
    %c0_i32_1 = arith.constant 0 : i32
    return %c0_i32, %c0_i32_0 : i32, i32
  }
  func.func @transform_4(%arg0: i32) -> (i32, i32) {
    %c0_i32 = arith.constant 0 : i32
    %c0_i32_0 = arith.constant 0 : i32
    %c0_i32_1 = arith.constant 0 : i32
    return %c0_i32, %c0_i32_0 : i32, i32
  }
  func.func @transform_5(%arg0: i32) -> (i32, i32) {
    %c0_i32 = arith.constant 0 : i32
    %c0_i32_0 = arith.constant 0 : i32
    %c0_i32_1 = arith.constant 0 : i32
    return %c0_i32, %c0_i32_0 : i32, i32
  }
  func.func @transform_6(%arg0: i32) -> i32 {
    %c0_i32 = arith.constant 0 : i32
    %c0_i32_0 = arith.constant 0 : i32
    return %c0_i32 : i32
  }
  func.func @transform_7(%arg0: i32) -> (i32, i32) {
    %c0_i32 = arith.constant 0 : i32
    %c0_i32_0 = arith.constant 0 : i32
    %c0_i32_1 = arith.constant 0 : i32
    return %c0_i32, %c0_i32_0 : i32, i32
  }
}

</mosaic_0001>

<llo_original>
// kernel: discriminator_forward.1
$region0: #{discriminator_forward.1}
  #allocation0 [shape = 'u32[]', space=smem, size = 0x4, offset = 0x4, fixed_abs, tag = 'smem constant byte address 0x4 - core index']
  #allocation1 [shape = 'u32[144,128]{1,0:T(1,128)}', space=vmem, size = 0x12000, scoped, tag = 'internal scratch']
  #allocation2 [shape = 'f32[1]{0:T(128)S(6)}', space=smem, size = 0x200, scoped, tag = 'scoped memory for discriminator_forward.1']
  %s0 = inlined_call_operand.vmem [shape: f32[8,128], index: 0, kind: input, shape index: {}]
  %s1 = inlined_call_operand.vmem [shape: bf16[128,64], index: 1, kind: input, shape index: {}]
  %s2 = inlined_call_operand.vmem [shape: f32[1,64], index: 2, kind: input, shape index: {}]
  %s3 = inlined_call_operand.vmem [shape: bf16[64,32], index: 3, kind: input, shape index: {}]
  %s4 = inlined_call_operand.vmem [shape: f32[1,32], index: 4, kind: input, shape index: {}]
  %s5 = inlined_call_operand.vmem [shape: f32[1,32], index: 5, kind: input, shape index: {}]
  %s6 = inlined_call_operand.<no memory space> [shape: f32[1], index: 6, kind: input, shape index: {}]
  %s7 = inlined_call_operand.vmem [shape: f32[8,1], index: 7, kind: output, shape index: {}]
  %s8 = sld [smem:[#allocation0]]
  $region38: #{discriminator_forward.1} parent=0
    _
  %s10 = ssub.s32 1, %s8
  %s11 = scalar_select 0, %s10, %s8
  %12 = sst [smem:[#allocation2]] %s6
  // Predicated region
  $region2: #{discriminator_forward.1} parent=0 // pred_check
    _
  $region3: #{discriminator_forward.1} parent=0 // pred_check_branch
    %14 = sbr.rel (0) target = $region5
  $region4: #{discriminator_forward.1} parent=0 // pred_region
    _
  $region5: #{discriminator_forward.1} parent=0 // pred_fallthru
    _
  // Predicated region
  $region6: #{discriminator_forward.1} parent=0 // pred_check
    _
  $region7: #{discriminator_forward.1} parent=0 // pred_check_branch
    %16 = sbr.rel (0) target = $region9
  $region8: #{discriminator_forward.1} parent=0 // pred_region
    _
  $region9: #{discriminator_forward.1} parent=0 // pred_fallthru
    _
  // Predicated region
  $region10: #{discriminator_forward.1} parent=0 // pred_check
    _
  $region11: #{discriminator_forward.1} parent=0 // pred_check_branch
    %18 = sbr.rel (0) target = $region13
  $region12: #{discriminator_forward.1} parent=0 // pred_region
    _
  $region13: #{discriminator_forward.1} parent=0 // pred_fallthru
    _
  // Predicated region
  $region14: #{discriminator_forward.1} parent=0 // pred_check
    _
  $region15: #{discriminator_forward.1} parent=0 // pred_check_branch
    %20 = sbr.rel (0) target = $region17
  $region16: #{discriminator_forward.1} parent=0 // pred_region
    _
  $region17: #{discriminator_forward.1} parent=0 // pred_fallthru
    _
  // Predicated region
  $region18: #{discriminator_forward.1} parent=0 // pred_check
    _
  $region19: #{discriminator_forward.1} parent=0 // pred_check_branch
    %22 = sbr.rel (0) target = $region21
  $region20: #{discriminator_forward.1} parent=0 // pred_region
    _
  $region21: #{discriminator_forward.1} parent=0 // pred_fallthru
    _
  // Predicated region
  $region22: #{discriminator_forward.1} parent=0 // pred_check
    _
  $region23: #{discriminator_forward.1} parent=0 // pred_check_branch
    %24 = sbr.rel (0) target = $region25
  $region24: #{discriminator_forward.1} parent=0 // pred_region
    _
  $region25: #{discriminator_forward.1} parent=0 // pred_fallthru
    _
  // Predicated region
  $region26: #{discriminator_forward.1} parent=0 // pred_check
    _
  $region27: #{discriminator_forward.1} parent=0 // pred_check_branch
    %26 = sbr.rel (0) target = $region29
  $region28: #{discriminator_forward.1} parent=0 // pred_region
    _
  $region29: #{discriminator_forward.1} parent=0 // pred_fallthru
    _
  %v28 = vld [vmem:[%s0] sm:$0xff]
  %v29 = vpack.c.bf16 %v28, %v28
  %v30 = vld [vmem:[%s1] sm:$0xf]
  %v31 = vld [vmem:[%s1 + $0x4] sm:$0xf]
  %v32 = vld [vmem:[%s1 + $0x8] sm:$0xf]
  %v33 = vld [vmem:[%s1 + $0xc] sm:$0xf]
  %v34 = vld [vmem:[%s1 + $0x10] sm:$0xf]
  %v35 = vld [vmem:[%s1 + $0x14] sm:$0xf]
  %v36 = vld [vmem:[%s1 + $0x18] sm:$0xf]
  %v37 = vld [vmem:[%s1 + $0x1c] sm:$0xf]
  %v38 = vld [vmem:[%s1 + $0x20] sm:$0xf]
  %v39 = vld [vmem:[%s1 + $0x24] sm:$0xf]
  %v40 = vld [vmem:[%s1 + $0x28] sm:$0xf]
  %v41 = vld [vmem:[%s1 + $0x2c] sm:$0xf]
  %v42 = vld [vmem:[%s1 + $0x30] sm:$0xf]
  %v43 = vld [vmem:[%s1 + $0x34] sm:$0xf]
  %v44 = vld [vmem:[%s1 + $0x38] sm:$0xf]
  %v45 = vld [vmem:[%s1 + $0x3c] sm:$0xf]
  %v46 = vld [vmem:[%s2] sm:$0x1]
  %v48 = vlaneseq
  %v49 = vshrl.u32 %v48, 7
  %v50 = vsub.s32 0, %v49
  %v51 = vrot.slane %v46, %v50
  %v69 = vunpack.c.l.b16 %v30
  %v70 = vunpack.c.l.b16 %v31
  %v71 = vunpack.c.l.b16 %v32
  %v72 = vunpack.c.l.b16 %v33
  %v73 = vunpack.c.l.b16 %v34
  %v74 = vunpack.c.l.b16 %v35
  %v75 = vunpack.c.l.b16 %v36
  %v76 = vunpack.c.l.b16 %v37
  %v77 = vunpack.c.l.b16 %v38
  %v78 = vunpack.c.l.b16 %v39
  %v79 = vunpack.c.l.b16 %v40
  %v80 = vunpack.c.l.b16 %v41
  %v81 = vunpack.c.l.b16 %v42
  %v82 = vunpack.c.l.b16 %v43
  %v83 = vunpack.c.l.b16 %v44
  %v84 = vunpack.c.l.b16 %v45
  %v85 = vpack.c.b16 %v70, %v69
  %v86 = vpack.c.b16 %v72, %v71
  %v87 = vpack.c.b16 %v74, %v73
  %v88 = vpack.c.b16 %v76, %v75
  %v89 = vpack.c.b16 %v78, %v77
  %v90 = vpack.c.b16 %v80, %v79
  %v91 = vpack.c.b16 %v82, %v81
  %v92 = vpack.c.b16 %v84, %v83
  %101 = vmatprep.subr.bf16.mxu0 0
  %102 = vmatpush1.bf16.msra.mxu0 %v85
  %103 = vmatprep.subr.bf16.mxu0 0
  %104 = vmatpush1.bf16.msra.mxu0 %v86
  %105 = vmatprep.subr.bf16.mxu0 0
  %106 = vmatpush1.bf16.msra.mxu0 %v87
  %107 = vmatprep.subr.bf16.mxu0 0
  %108 = vmatpush1.bf16.msra.mxu0 %v88
  %109 = vmatprep.subr.bf16.mxu0 0
  %110 = vmatpush1.bf16.msra.mxu0 %v89
  %111 = vmatprep.subr.bf16.mxu0 0
  %112 = vmatpush1.bf16.msra.mxu0 %v90
  %113 = vmatprep.subr.bf16.mxu0 0
  %114 = vmatpush1.bf16.msra.mxu0 %v91
  %115 = vmatprep.subr.bf16.mxu0 0
  %116 = vmatpush1.bf16.msra.mxu0 %v92
  %117 = vmatprep.subr.bf16.mxu0 0
  %118 = vmatpush1.bf16.msra.mxu0 0
  %119 = vmatprep.subr.bf16.mxu0 0
  %120 = vmatpush1.bf16.msra.mxu0 0
  %121 = vmatprep.subr.bf16.mxu0 0
  %122 = vmatpush1.bf16.msra.mxu0 0
  %123 = vmatprep.subr.bf16.mxu0 0
  %124 = vmatpush1.bf16.msra.mxu0 0
  %125 = vmatprep.subr.bf16.mxu0 0
  %126 = vmatpush1.bf16.msra.mxu0 0
  %127 = vmatprep.subr.bf16.mxu0 0
  %128 = vmatpush1.bf16.msra.mxu0 0
  %129 = vmatprep.subr.bf16.mxu0 0
  %130 = vmatpush1.bf16.msra.mxu0 0
  %131 = vmatprep.subr.bf16.mxu0 0
  %132 = vmatpush1.bf16.msra.mxu0 0
  %133 = vmatprep.mubr.bf16.mxu0 0
  %134 = vmatmul.mubr.bf16.gmra.mrb[0].mxu0 %v29
  %v135 = vpop.f32.mrb[0].mxu0
  %v136 = vadd.f32 %v51, %v135
  %v137 = vpop.f32.mrb[0].mxu0
  %v138 = vpop.f32.mrb[0].mxu0
  %v139 = vpop.f32.mrb[0].mxu0
  %140 = vdwg.mxu0
  %vm141 = vcmp.gt.f32.partialorder %v136, 0.0
  %v142 = vmul.f32 %v136, 0.2
  %v143 = vsel %vm141, %v136, %v142
  %v144 = vpack.c.bf16 %v143, %v143
  %v145 = vld [vmem:[%s3] sm:$0xf]
  %v146 = vld [vmem:[%s3 + $0x4] sm:$0xf]
  %v147 = vld [vmem:[%s3 + $0x8] sm:$0xf]
  %v148 = vld [vmem:[%s3 + $0xc] sm:$0xf]
  %v149 = vld [vmem:[%s3 + $0x10] sm:$0xf]
  %v150 = vld [vmem:[%s3 + $0x14] sm:$0xf]
  %v151 = vld [vmem:[%s3 + $0x18] sm:$0xf]
  %v152 = vld [vmem:[%s3 + $0x1c] sm:$0xf]
  %v153 = vld [vmem:[%s4] sm:$0x1]
  %v155 = vlaneseq
  %v156 = vshrl.u32 %v155, 7
  %v157 = vsub.s32 0, %v156
  %v158 = vrot.slane %v153, %v157
  %v168 = vunpack.c.l.b16 %v145
  %v169 = vunpack.c.l.b16 %v146
  %v170 = vunpack.c.l.b16 %v147
  %v171 = vunpack.c.l.b16 %v148
  %v172 = vunpack.c.l.b16 %v149
  %v173 = vunpack.c.l.b16 %v150
  %v174 = vunpack.c.l.b16 %v151
  %v175 = vunpack.c.l.b16 %v152
  %v176 = vpack.c.b16 %v169, %v168
  %v177 = vpack.c.b16 %v171, %v170
  %v178 = vpack.c.b16 %v173, %v172
  %v179 = vpack.c.b16 %v175, %v174
  %vm184 = vcmask 523264
  %v186 = vsel %vm184, %v144, 0
  %188 = vmatprep.subr.bf16.mxu0 0
  %189 = vmatpush1.bf16.msra.mxu0 %v176
  %190 = vmatprep.subr.bf16.mxu0 0
  %191 = vmatpush1.bf16.msra.mxu0 %v177
  %192 = vmatprep.subr.bf16.mxu0 0
  %193 = vmatpush1.bf16.msra.mxu0 %v178
  %194 = vmatprep.subr.bf16.mxu0 0
  %195 = vmatpush1.bf16.msra.mxu0 %v179
  %196 = vmatprep.subr.bf16.mxu0 0
  %197 = vmatpush1.bf16.msra.mxu0 0
  %198 = vmatprep.subr.bf16.mxu0 0
  %199 = vmatpush1.bf16.msra.mxu0 0
  %200 = vmatprep.subr.bf16.mxu0 0
  %201 = vmatpush1.bf16.msra.mxu0 0
  %202 = vmatprep.subr.bf16.mxu0 0
  %203 = vmatpush1.bf16.msra.mxu0 0
  %204 = vmatprep.subr.bf16.mxu0 0
  %205 = vmatpush1.bf16.msra.mxu0 0
  %206 = vmatprep.subr.bf16.mxu0 0
  %207 = vmatpush1.bf16.msra.mxu0 0
  %208 = vmatprep.subr.bf16.mxu0 0
  %209 = vmatpush1.bf16.msra.mxu0 0
  %210 = vmatprep.subr.bf16.mxu0 0
  %211 = vmatpush1.bf16.msra.mxu0 0
  %212 = vmatprep.subr.bf16.mxu0 0
  %213 = vmatpush1.bf16.msra.mxu0 0
  %214 = vmatprep.subr.bf16.mxu0 0
  %215 = vmatpush1.bf16.msra.mxu0 0
  %216 = vmatprep.subr.bf16.mxu0 0
  %217 = vmatpush1.bf16.msra.mxu0 0
  %218 = vmatprep.subr.bf16.mxu0 0
  %219 = vmatpush1.bf16.msra.mxu0 0
  %220 = vmatprep.mubr.bf16.mxu0 0
  %221 = vmatmul.mubr.bf16.gmra.mrb[0].mxu0 %v186
  %v222 = vpop.f32.mrb[0].mxu0
  %v223 = vadd.f32 %v158, %v222
  %v224 = vpop.f32.mrb[0].mxu0
  %v225 = vpop.f32.mrb[0].mxu0
  %v226 = vpop.f32.mrb[0].mxu0
  %227 = vdwg.mxu0
  %vm228 = vcmp.gt.f32.partialorder %v223, 0.0
  %v229 = vmul.f32 %v223, 0.2
  %v230 = vsel %vm228, %v223, %v229
  %v231 = vld [vmem:[%s5] sm:$0x1]
  %v233 = vlaneseq
  %v234 = vshrl.u32 %v233, 7
  %v235 = vsub.s32 0, %v234
  %v236 = vrot.slane %v231, %v235
  %v238 = vmul.f32 %v230, %v236
  %vm239 = vcmask 261120
  %v240 = vsel %vm239, %v238, 0.0
  %241 = vadd.xlane.f32.xlu0 %v240
  %v242 = vpop.xlane.xlu0 %241
  %s243 = sld [smem:[#allocation2]]
  %v244 = vstv %s243
  %v245 = vadd.f32 %v242, %v244
  %v246 = vxor.u32 %v245, 2147483648
  %v247 = vmul.f32 %v246, 1.442695
  %v248 = vpow.pop %v247
  %v249 = vadd.f32 %v248, 1.0
  %v250 = vrcp.pop %v249
  %v251 = vmul.f32 1.0, %v250
  %vm252 = vcmask 7168
  %253 = vst.msk [vmem:[%s7] sm:$0xff] %vm252, %v251
  // Predicated region
  $region30: #{discriminator_forward.1} parent=0 // pred_check
    _
  $region31: #{discriminator_forward.1} parent=0 // pred_check_branch
    %255 = sbr.rel (0) target = $region33
  $region32: #{discriminator_forward.1} parent=0 // pred_region
    _
  $region33: #{discriminator_forward.1} parent=0 // pred_fallthru
    _
  // Predicated region
  $region34: #{discriminator_forward.1} parent=0 // pred_check
    _
  $region35: #{discriminator_forward.1} parent=0 // pred_check_branch
    %257 = sbr.rel (0) target = $region37
  $region36: #{discriminator_forward.1} parent=0 // pred_region
    _
  $region37: #{discriminator_forward.1} parent=0 // pred_fallthru
    _

</llo_original>
